<compile_context>
chip_gen: v7x
topology: tpu7x:2x2x1
jax: 0.10.0
libtpu: 0.0.40
codegen_flags: <defaults>
</compile_context>

<pallas_src>
import jax
import jax.numpy as jnp
from jax.experimental import pallas as pl
from jax.experimental.pallas import tpu as pltpu


def _implicit_a_kernel(imp_ref, x_ref, o_ref):
    # imp_ref: (t_r, 1) per-row bias; x_ref / o_ref: (t_r, t_hw)
    # Broadcast add over the lane (spatial) axis; promotion (if any) happens
    # in-register, store is in the output dtype.
    o_ref[...] = x_ref[...] + imp_ref[...]


def _round_up(x, m):
    return ((x + m - 1) // m) * m


def _vmem_limit_bytes():
    # Per-generation VMEM budget: ~3/4 of physical VMEM
    #   v7x  : 64 MiB physical -> ~48 MiB
    #   v5e/v6e : 128 MiB physical -> ~96 MiB
    # Conservative fallback (safe on v7x) if the query is unavailable.
    try:
        phys = pltpu.get_tpu_info().vmem_capacity_bytes
        return int(phys * 3 // 4)
    except Exception:
        return 48 * 1024 * 1024


def implicit_a(x, implicit, *, block_rows=128, block_cols=8192, donate_x=False):
    """x: (N, C, H, W), implicit: (1, C, 1, 1) -> (N, C, H, W).

    block_rows : row (sublane) tile cap; must be a multiple of the dtype
                 packing factor (8 f32 / 16 bf16 / 32 int8).
    block_cols : lane tile cap; multiple of 128. Default 8192 so common YOLO
                 spatial sizes take the full-HW contiguous-DMA path.
    donate_x   : if True (and dtypes match), alias the output onto x's buffer.
    """
    N, C, H, W = x.shape
    HW = H * W
    R = N * C

    # Match PyTorch mixed-precision semantics (f32 param + bf16 x -> f32 out).
    out_dtype = jnp.promote_types(x.dtype, implicit.dtype)

    # Sub-32-bit dtypes pack 2/4 rows per sublane -> dtype-aware row alignment.
    itemsize = jnp.dtype(x.dtype).itemsize
    row_align = max(8, 32 // itemsize)

    assert block_cols % 128 == 0, "lane tile must be a multiple of 128"
    assert block_rows % row_align == 0, (
        f"row tile must be a multiple of {row_align} for dtype {x.dtype}"
    )

    # 2D lane-dense layout: rows = N*C, lanes = H*W.
    x2 = x.reshape(R, HW)

    # One bias value per row (row r belongs to channel r % C), already in the
    # output dtype so the store never promotes. Kept lane-sparse (R, 1): bias
    # HBM traffic is negligible and the lane broadcast is free VPU work.
    imp_rows = jnp.broadcast_to(
        implicit.reshape(1, C).astype(out_dtype), (N, C)
    ).reshape(R, 1)

    # Prefer the full extent on each axis (contiguous single-range DMA);
    # otherwise fall back to wide-and-short aligned tiles.
    t_hw = HW if HW <= block_cols else block_cols
    t_r = R if R <= block_rows else block_rows

    # v7x megacore balance: avoid a degenerate single-block grid when there is
    # enough data to split across the 2 TensorCores (no-op on v5e/v6e).
    if pl.cdiv(R, t_r) * pl.cdiv(HW, t_hw) < 2 and R >= 2 * row_align:
        t_r = _round_up(pl.cdiv(R, 2), row_align)

    # Grid: rows outer, lanes inner -> the bias block index is constant across
    # the inner (lane) loop, so it is not re-fetched per lane tile.
    grid = (pl.cdiv(R, t_r), pl.cdiv(HW, t_hw))

    io_aliases = {}
    if donate_x and out_dtype == x.dtype:
        io_aliases = {1: 0}  # output block depends only on same-index x block

    out = pl.pallas_call(
        _implicit_a_kernel,
        out_shape=jax.ShapeDtypeStruct((R, HW), out_dtype),
        grid_spec=pltpu.PrefetchScalarGridSpec(
            num_scalar_prefetch=0,
            grid=grid,
            in_specs=[
                # per-row bias: follows the row-tile index, ignores lane tile
                pl.BlockSpec((t_r, 1), lambda r, c: (r, 0)),
                # activation tile
                pl.BlockSpec((t_r, t_hw), lambda r, c: (r, c)),
            ],
            out_specs=pl.BlockSpec((t_r, t_hw), lambda r, c: (r, c)),
        ),
        compiler_params=pltpu.CompilerParams(
            # both axes independent -> shard across v7x's 2 TensorCores
            dimension_semantics=("parallel", "parallel"),
            vmem_limit_bytes=_vmem_limit_bytes(),
        ),
        input_output_aliases=io_aliases,
    )(imp_rows, x2)

    return out.reshape(N, C, H, W)


if __name__ == "__main__":
    key = jax.random.PRNGKey(0)
    k_imp, k_x = jax.random.split(key)

    N, C, H, W = 2, 4, 16, 16
    mean, std = 0.0, 0.02

    # deterministic parameter init matching nn.init.normal_(mean=0.0, std=0.02)
    implicit = mean + std * jax.random.normal(k_imp, (1, C, 1, 1), dtype=jnp.float32)
    x = jax.random.normal(k_x, (N, C, H, W), dtype=jnp.float32)

    ref = implicit + x  # plain-JAX reference, same broadcast as torch

    # 1) default config: full-HW contiguous block path
    out = implicit_a(x, implicit)
    out = jax.block_until_ready(out)
    assert out.shape == (N, C, H, W)
    assert out.dtype == ref.dtype
    assert jnp.allclose(out, ref, atol=1e-6), "mismatch vs reference (default tiles)"

    # 2) small tiles: exercise the tiled 2-D grid + edge handling on this shape
    out_tiled = implicit_a(x, implicit, block_rows=8, block_cols=128)
    out_tiled = jax.block_until_ready(out_tiled)
    assert jnp.allclose(out_tiled, ref, atol=1e-6), "mismatch vs reference (small tiles)"

    print("KERNEL_OK")
</pallas_src>

<mosaic_0001>
module attributes {stable_mosaic.version = 11 : i64} {
  func.func @_implicit_a_kernel(%arg0: i32, %arg1: i32, %arg2: memref<8x1xf32, #tpu.memory_space<vmem>>, %arg3: memref<8x256xf32, #tpu.memory_space<vmem>>, %arg4: memref<8x256xf32, #tpu.memory_space<vmem>>) attributes {dimension_semantics = [#tpu.dimension_semantics<parallel>, #tpu.dimension_semantics<parallel>], iteration_bounds = array<i64: 1, 1>, scalar_prefetch = 0 : i64, scratch_operands = 0 : i64, tpu.core_type = #tpu.core_type<tc>, window_params = [{transform_indices = @transform_0, window_bounds = array<i64: 8, 1>}, {transform_indices = @transform_1, window_bounds = array<i64: 8, 256>}, {transform_indices = @transform_2, window_bounds = array<i64: 8, 256>}]} {
    %c0 = arith.constant 0 : index
    %c0_0 = arith.constant 0 : index
    %0 = vector.load %arg3[%c0, %c0_0] : memref<8x256xf32, #tpu.memory_space<vmem>>, vector<8x256xf32>
    %c0_1 = arith.constant 0 : index
    %c0_2 = arith.constant 0 : index
    %1 = vector.load %arg2[%c0_1, %c0_2] : memref<8x1xf32, #tpu.memory_space<vmem>>, vector<8x1xf32>
    %2 = vector.broadcast %1 : vector<8x1xf32> to vector<8x256xf32>
    %3 = arith.addf %0, %2 : vector<8x256xf32>
    %c0_3 = arith.constant 0 : index
    %c0_4 = arith.constant 0 : index
    %4 = vector.load %arg4[%c0_3, %c0_4] : memref<8x256xf32, #tpu.memory_space<vmem>>, vector<8x256xf32>
    tpu.vector_store %arg4[%c0_3, %c0_4], %3 {strides = array<i32>} : memref<8x256xf32, #tpu.memory_space<vmem>>, vector<8x256xf32>,
    return
  }
  func.func @transform_0(%arg0: i32, %arg1: i32) -> (i32, i32) {
    %c0_i32 = arith.constant 0 : i32
    %c0_i32_0 = arith.constant 0 : i32
    return %arg0, %c0_i32 : i32, i32
  }
  func.func @transform_1(%arg0: i32, %arg1: i32) -> (i32, i32) {
    %c0_i32 = arith.constant 0 : i32
    return %arg0, %arg1 : i32, i32
  }
  func.func @transform_2(%arg0: i32, %arg1: i32) -> (i32, i32) {
    %c0_i32 = arith.constant 0 : i32
    return %arg0, %arg1 : i32, i32
  }
}

</mosaic_0001>

<llo_original>
// kernel: tpu_custom_call.1
$region0: #{tpu_custom_call.1}
  #allocation0 [shape = 'u32[]', space=smem, size = 0x4, offset = 0x4, fixed_abs, tag = 'smem constant byte address 0x4 - core index']
  #allocation1 [shape = 'u32[144,128]{1,0:T(1,128)}', space=vmem, size = 0x12000, scoped, tag = 'internal scratch']
  %s0 = inlined_call_operand.vmem [shape: f32[8,1], index: 0, kind: input, shape index: {}]
  %s1 = inlined_call_operand.hbm [shape: f32[8,256], index: 1, kind: input, shape index: {}]
  %s2 = inlined_call_operand.hbm [shape: f32[8,256], index: 2, kind: output, shape index: {}]
  %s3 = sld [smem:[#allocation0]]
  $region22: #{tpu_custom_call.1} parent=0
    _
  %s5 = ssub.s32 1, %s3
  %s6 = scalar_select 0, %s5, %s3
  $region1: #{tpu_custom_call.1} parent=0
    #allocation2 [shape = 'u8[8192]{0}', space=vmem, size = 0x2000, scoped, tag = 'input window, operand 1, single buffered']
    #allocation3 [shape = 's32[1]{0}', space=sflag, size = 0x4, scoped, tag = 'scoped memory for tpu_custom_call.1']
    #allocation4 [shape = 's32[1]{0}', space=sflag, size = 0x4, scoped, tag = 'scoped memory for tpu_custom_call.1']
    #allocation5 [shape = 'u8[8192]{0}', space=vmem, size = 0x2000, scoped, tag = 'output window, operand 0, single buffered']
    %7 = vsyncpa [#allocation3], 0
    %8 = vsyncpa [#allocation4], 0
    // Predicated region
    $region2: #{tpu_custom_call.1} parent=1 // pred_check
      _
    $region3: #{tpu_custom_call.1} parent=1 // pred_check_branch
      %10 = sbr.rel (0) target = $region5
    $region4: #{tpu_custom_call.1} parent=1 // pred_region
      _
    $region5: #{tpu_custom_call.1} parent=1 // pred_fallthru
      _
    // Predicated region
    $region6: #{tpu_custom_call.1} parent=1 // pred_check
      _
    $region7: #{tpu_custom_call.1} parent=1 // pred_check_branch
      %12 = sbr.rel (0) target = $region9
    $region8: #{tpu_custom_call.1} parent=1 // pred_region
      %s14 = ssub.s32 256, 256
      %15 = vsyncadd [#allocation3], %s14
      %s17 = sshll.u32 [#allocation2], 4
      %s18 = int_to_ptr.vmem [resolvable:$true] %s17
      %20 = dma.hbm_to_vmem [thread:$0]  %s1, 256, %s18, [#allocation3]
    $region9: #{tpu_custom_call.1} parent=1 // pred_fallthru
      _
    // Predicated region
    $region10: #{tpu_custom_call.1} parent=1 // pred_check
      _
    $region11: #{tpu_custom_call.1} parent=1 // pred_check_branch
      %22 = sbr.rel (0) target = $region13
    $region12: #{tpu_custom_call.1} parent=1 // pred_region
      %23 = dma.done [#allocation3], 256
    $region13: #{tpu_custom_call.1} parent=1 // pred_fallthru
      _
    %v24 = vld [vmem:[#allocation2] sm:$0xff]
    %v25 = vld [vmem:[#allocation2 + $0x8] sm:$0xff]
    %v26 = vld [vmem:[%s0] sm:$0xff]
    %28 = vset.pattern.permute.xlu0 0
    %29 = vperm.xlu0 %28, %v26
    %v30 = vpop.permute.xlu0 %29
    %v32 = vadd.f32 %v24, %v30
    %v33 = vadd.f32 %v25, %v30
    %34 = vst [vmem:[#allocation5] sm:$0xff] %v32
    %35 = vst [vmem:[#allocation5 + $0x8] sm:$0xff] %v33
    // Predicated region
    $region14: #{tpu_custom_call.1} parent=1 // pred_check
      _
    $region15: #{tpu_custom_call.1} parent=1 // pred_check_branch
      %37 = sbr.rel (0) target = $region17
    $region16: #{tpu_custom_call.1} parent=1 // pred_region
      %s39 = ssub.s32 256, 256
      %40 = vsyncadd [#allocation4], %s39
      %s42 = sshll.u32 [#allocation5], 4
      %s43 = int_to_ptr.vmem [resolvable:$true] %s42
      %45 = dma.vmem_to_hbm [thread:$0]  %s43, 256, %s2, [#allocation4]
    $region17: #{tpu_custom_call.1} parent=1 // pred_fallthru
      _
    // Predicated region
    $region18: #{tpu_custom_call.1} parent=1 // pred_check
      _
    $region19: #{tpu_custom_call.1} parent=1 // pred_check_branch
      %47 = sbr.rel (0) target = $region21
    $region20: #{tpu_custom_call.1} parent=1 // pred_region
      %48 = dma.done [#allocation4], 256
    $region21: #{tpu_custom_call.1} parent=1 // pred_fallthru
      _
    %49 = vsyncpa [#allocation3], 1
    %50 = vsyncpa [#allocation4], 1

</llo_original>
